<compile_context>
chip_gen: v7x
topology: tpu7x:2x2x1
jax: 0.10.0
libtpu: 0.0.40
codegen_flags: <defaults>
</compile_context>

<pallas_src>
import math

import jax
import jax.numpy as jnp
from jax.experimental import pallas as pl
from jax.experimental.pallas import tpu as pltpu

_LANE = 128
_SUBLANE = 8


def _round_up(x, m):
    return ((x + m - 1) // m) * m


def _vmem_budget(default_bytes=64 * 1024 * 1024):
    """~80% of this generation's physical VMEM (v5e/v6e: 128 MiB, v7x: 64 MiB)."""
    try:
        cap = getattr(pltpu.get_tpu_info(), "vmem_capacity_bytes", default_bytes)
    except Exception:  # unknown backend / interpret mode
        cap = default_bytes
    return int(cap * 0.8)


def _plan_packing(e, h, max_pack=8):
    """Pick (pack factor p, padded E, padded H) so p*E_pad and p*H_pad are 128-multiples."""
    pe = _LANE // math.gcd(_LANE, e)
    ph = _LANE // math.gcd(_LANE, h)
    p = pe * ph // math.gcd(pe, ph)  # lcm(pe, ph); always divides 128
    if p > max_pack:
        # kron weight grows as p^2: prefer a modest p plus zero padding over a silent
        # p=1 fallback (which would reintroduce <128-lane masked output stores).
        p = pe if pe <= max_pack else (ph if ph <= max_pack else 1)
    step = _LANE // p
    return p, _round_up(e, step), _round_up(h, step)


def _prepare_packed_linear(weight, bias, compute_dtype=jnp.bfloat16, *,
                           max_pack=8, weight_block_bytes=None):
    """One-time packing of the nn.Linear parameters (hoisted out of the per-call path).

    Builds kron(I_p, W^T) so that p consecutive token rows multiply as one lane-dense
    (multiple-of-128) packed row, plus the matching tiled bias.  Also chooses the output
    column tile `tn` (N-tiling) so the resident weight block stays well inside the
    generation's VMEM budget (v7x: 64 MiB; v5e/v6e: 128 MiB).
    """
    h, e = weight.shape
    p, e_pad, h_pad = _plan_packing(e, h, max_pack)
    k, n = p * e_pad, p * h_pad
    cdt = jnp.dtype(compute_dtype)
    cbytes = cdt.itemsize

    if weight_block_bytes is None:
        weight_block_bytes = _vmem_budget() // 3
    tn = n
    while tn > _LANE and 2 * k * tn * cbytes > weight_block_bytes:
        tn = _round_up(pl.cdiv(tn, 2), _LANE)
    n_tiles = pl.cdiv(n, tn)
    n_pad = n_tiles * tn

    w_t = jnp.pad(weight.T.astype(jnp.float32), ((0, e_pad - e), (0, h_pad - h)))
    w_packed = jnp.kron(jnp.eye(p, dtype=jnp.float32), w_t)            # (k, n)
    w_packed = jnp.pad(w_packed, ((0, 0), (0, n_pad - n))).astype(cdt)
    b_packed = jnp.tile(jnp.pad(bias.astype(jnp.float32), (0, h_pad - h)), p)
    b_packed = jnp.pad(b_packed, (0, n_pad - n)).reshape(1, n_pad)     # f32 bias

    return dict(p=p, e=e, h=h, e_pad=e_pad, h_pad=h_pad, k=k, n=n,
                tn=tn, n_tiles=n_tiles, n_pad=n_pad,
                w=w_packed, b=b_packed, compute_dtype=cdt)


def _linear_bias_kernel(x_ref, w_ref, b_ref, o_ref):
    # x:(tm,K)  w:(K,tn)  b:(1,tn) f32  o:(tm,tn); f32 accumulation, cast on final store.
    prec = (jax.lax.Precision.HIGHEST
            if x_ref.dtype == jnp.float32 else jax.lax.Precision.DEFAULT)
    acc = jnp.dot(x_ref[...], w_ref[...],
                  preferred_element_type=jnp.float32, precision=prec)
    o_ref[...] = (acc + b_ref[...]).astype(o_ref.dtype)


def packed_linear_pallas(x_flat, packed, *, tm=1024, out_dtype=None):
    """y = x_flat @ W^T + b with lane-dense packing.  x_flat:(M,E) -> (M,H)."""
    m, e = x_flat.shape
    p, e_pad, k = packed["p"], packed["e_pad"], packed["k"]
    tn, n_tiles, n_pad = packed["tn"], packed["n_tiles"], packed["n_pad"]
    h, h_pad, n = packed["h"], packed["h_pad"], packed["n"]
    cdt = packed["compute_dtype"]
    odt = jnp.dtype(out_dtype) if out_dtype is not None else cdt
    cbytes, obytes = cdt.itemsize, odt.itemsize

    budget = _vmem_budget()
    # Row tiling in packed space: biggest tile that fits VMEM, but keep >= 2 row tiles
    # whenever possible so both v7x TensorCores get work via the parallel grid axis.
    mp = pl.cdiv(m, p)
    fixed = 2 * (k * tn * cbytes + tn * 4)            # resident weight + bias blocks (2x)
    row_bytes = 2 * (k * cbytes + tn * obytes)        # double-buffered x + out rows
    tm_cap = max(_SUBLANE,
                 ((budget - fixed) // max(row_bytes, 1)) // _SUBLANE * _SUBLANE)
    tm_eff = min(tm, _round_up(mp, _SUBLANE), tm_cap)
    if mp > _SUBLANE and pl.cdiv(mp, tm_eff) < 2:
        tm_eff = min(tm_eff, _round_up(pl.cdiv(mp, 2), _SUBLANE))
    mp_pad = _round_up(mp, tm_eff)
    m_pad = mp_pad * p
    grid = (mp_pad // tm_eff, n_tiles)

    # One producer pass: cast -> pad -> row-major pack reshape feeding the kernel input.
    x_packed = jnp.pad(x_flat.astype(cdt),
                       ((0, m_pad - m), (0, e_pad - e))).reshape(mp_pad, k)

    cost = pl.CostEstimate(
        flops=2 * m * e * h,   # useful FLOPs only, not the p-times kron redundancy
        transcendentals=0,
        bytes_accessed=(mp_pad * k + k * n_pad) * cbytes
                       + n_pad * 4 + mp_pad * n_pad * obytes,
    )
    vmem_need = fixed + tm_eff * row_bytes
    vmem_limit = int(min(budget, max(vmem_need + (8 << 20), 32 << 20)))

    y_packed = pl.pallas_call(
        _linear_bias_kernel,
        out_shape=jax.ShapeDtypeStruct((mp_pad, n_pad), odt),
        grid_spec=pltpu.PrefetchScalarGridSpec(
            num_scalar_prefetch=0,
            grid=grid,
            in_specs=[
                pl.BlockSpec((tm_eff, k), lambda i, j: (i, 0)),
                pl.BlockSpec((k, tn), lambda i, j: (0, j)),
                pl.BlockSpec((1, tn), lambda i, j: (0, j)),
            ],
            out_specs=pl.BlockSpec((tm_eff, tn), lambda i, j: (i, j)),
        ),
        compiler_params=pltpu.CompilerParams(
            dimension_semantics=("parallel", "parallel"),
            vmem_limit_bytes=vmem_limit,
        ),
        cost_estimate=cost,
    )(x_packed, packed["w"], packed["b"])

    if n_pad != n:
        y_packed = y_packed[:, :n]     # drop N-tiling pad columns (rare, large-H case)
    # Undo the row packing (free row-major reshape) and drop pad rows / pad columns.
    return y_packed.reshape(m_pad, h_pad)[:m, :h]


class EncoderParams:
    """Deterministic parameter construction mirroring encoder.__init__."""

    def __init__(self, num_embeddings, embedding_size, hidden_size, param_init, key):
        k_emb, k_w, k_b = jax.random.split(key, 3)
        # nn.Embedding default init: N(0, 1) -- built for fidelity, unused in forward.
        self.embedding_weight = jax.random.normal(
            k_emb, (num_embeddings, embedding_size), dtype=jnp.float32)
        # nn.Linear: weight ~ N(0, param_init), bias ~ U(-0.01, 0.01)
        self.input_weight = param_init * jax.random.normal(
            k_w, (hidden_size, embedding_size), dtype=jnp.float32)
        self.input_bias = jax.random.uniform(
            k_b, (hidden_size,), dtype=jnp.float32, minval=-0.01, maxval=0.01)
        self.embedding_size = embedding_size
        self.hidden_size = hidden_size
        self._packed_cache = {}

    def packed_linear(self, compute_dtype=jnp.bfloat16):
        """One-time (cached) kron/bias packing -- hoisted out of the forward path."""
        key = jnp.dtype(compute_dtype).name
        if key not in self._packed_cache:
            self._packed_cache[key] = _prepare_packed_linear(
                self.input_weight, self.input_bias, compute_dtype)
        return self._packed_cache[key]


def encoder_forward(params, sent1, sent2, *, compute_dtype=jnp.bfloat16,
                    out_dtype=None, tm=1024):
    """Pallas implementation of encoder.forward(sent1, sent2).

    Default numerics: bf16 matmul inputs + bf16 output (f32 accumulation/bias inside the
    kernel).  For strict f32 fidelity pass compute_dtype=jnp.float32, out_dtype=jnp.float32.
    """
    b1, _, e = sent1.shape
    h = params.hidden_size

    packed = params.packed_linear(compute_dtype)

    # Per-sentence calls: each cast/pad/pack chain fuses into one producer pass instead
    # of materializing a separate concatenation; launch overhead (~us) is negligible for
    # this HBM-bound op.
    y1 = packed_linear_pallas(sent1.reshape(-1, e), packed, tm=tm, out_dtype=out_dtype)
    y2 = packed_linear_pallas(sent2.reshape(-1, e), packed, tm=tm, out_dtype=out_dtype)

    # NB: the PyTorch reference views BOTH outputs with sent1's batch size; preserved
    # verbatim (requires sent2's row count to be divisible by b1, like the .view()).
    return y1.reshape(b1, -1, h), y2.reshape(b1, -1, h)


def encoder_reference(params, sent1, sent2):
    """Plain-JAX reference (full-precision matmul) for correctness checking."""
    def lin(x):
        return (jnp.matmul(x, params.input_weight.T,
                           precision=jax.lax.Precision.HIGHEST) + params.input_bias)
    b = sent1.shape[0]
    return (lin(sent1).reshape(b, -1, params.hidden_size),
            lin(sent2).reshape(b, -1, params.hidden_size))


if __name__ == "__main__":
    # Small, module-consistent shapes.
    num_embeddings = 16
    embedding_size = 32
    hidden_size = 32
    param_init = 0.1
    batch = 2
    seq = 8

    key = jax.random.PRNGKey(0)
    k_params, k_s1, k_s2, k_w2, k_b2, k_x2 = jax.random.split(key, 6)

    params = EncoderParams(
        num_embeddings, embedding_size, hidden_size, param_init, k_params)
    sent1 = jax.random.normal(k_s1, (batch, seq, embedding_size), dtype=jnp.float32)
    sent2 = jax.random.normal(k_s2, (batch, seq, embedding_size), dtype=jnp.float32)

    r1, r2 = encoder_reference(params, sent1, sent2)

    # Default path: bf16 inputs/outputs, f32 accumulation (minimum HBM traffic).
    s1_bf, s2_bf = encoder_forward(params, sent1, sent2)
    s1_bf = jax.block_until_ready(s1_bf)
    s2_bf = jax.block_until_ready(s2_bf)
    assert s1_bf.shape == (batch, seq, hidden_size)
    assert s2_bf.shape == (batch, seq, hidden_size)
    assert jnp.allclose(s1_bf.astype(jnp.float32), r1, atol=3e-2, rtol=3e-2)
    assert jnp.allclose(s2_bf.astype(jnp.float32), r2, atol=3e-2, rtol=3e-2)

    # f32-fidelity path: tight check of the packing / tiling / bias logic.
    s1_f, s2_f = encoder_forward(params, sent1, sent2,
                                 compute_dtype=jnp.float32, out_dtype=jnp.float32)
    s1_f = jax.block_until_ready(s1_f)
    s2_f = jax.block_until_ready(s2_f)
    assert jnp.allclose(s1_f, r1, atol=1e-3, rtol=1e-3)
    assert jnp.allclose(s2_f, r2, atol=1e-3, rtol=1e-3)

    # Exercise the N-tiled (multi output-column tile) + multi-row-tile path by forcing a
    # small weight-block budget, so the large-E/H code path is covered on TPU.
    e2, h2, m2 = 64, 256, 384
    w2 = 0.1 * jax.random.normal(k_w2, (h2, e2), dtype=jnp.float32)
    b2 = jax.random.uniform(k_b2, (h2,), dtype=jnp.float32, minval=-0.01, maxval=0.01)
    x2 = jax.random.normal(k_x2, (m2, e2), dtype=jnp.float32)
    packed2 = _prepare_packed_linear(w2, b2, jnp.float32,
                                     weight_block_bytes=300_000)  # -> tn=256, 2 N-tiles
    y2 = packed_linear_pallas(x2, packed2, tm=1024, out_dtype=jnp.float32)
    y2 = jax.block_until_ready(y2)
    r_y2 = jnp.matmul(x2, w2.T, precision=jax.lax.Precision.HIGHEST) + b2
    assert y2.shape == (m2, h2)
    assert jnp.allclose(y2, r_y2, atol=1e-3, rtol=1e-3)

    print("KERNEL_OK")
</pallas_src>

<mosaic_0001>
module attributes {stable_mosaic.version = 11 : i64} {
  func.func @_linear_bias_kernel(%arg0: i32, %arg1: i32, %arg2: memref<8x128xbf16, #tpu.memory_space<vmem>>, %arg3: memref<128x128xbf16, #tpu.memory_space<vmem>>, %arg4: memref<1x128xf32, #tpu.memory_space<vmem>>, %arg5: memref<8x128xbf16, #tpu.memory_space<vmem>>) attributes {dimension_semantics = [#tpu.dimension_semantics<parallel>, #tpu.dimension_semantics<parallel>], iteration_bounds = array<i64: 1, 1>, scalar_prefetch = 0 : i64, scratch_operands = 0 : i64, tpu.core_type = #tpu.core_type<tc>, window_params = [{transform_indices = @transform_0, window_bounds = array<i64: 8, 128>}, {transform_indices = @transform_1, window_bounds = array<i64: 128, 128>}, {transform_indices = @transform_2, window_bounds = array<i64: 1, 128>}, {transform_indices = @transform_3, window_bounds = array<i64: 8, 128>}]} {
    %c0 = arith.constant 0 : index
    %c0_0 = arith.constant 0 : index
    %0 = vector.load %arg2[%c0, %c0_0] : memref<8x128xbf16, #tpu.memory_space<vmem>>, vector<8x128xbf16>
    %c0_1 = arith.constant 0 : index
    %c0_2 = arith.constant 0 : index
    %1 = vector.load %arg3[%c0_1, %c0_2] : memref<128x128xbf16, #tpu.memory_space<vmem>>, vector<128x128xbf16>
    %cst = arith.constant dense<0.000000e+00> : vector<8x128xf32>
    %2 = tpu.matmul %0, %1, %cst {dimension_numbers = #tpu.dot_dimension_numbers<[1], [0], [0], [1], [0, 0, 1, 1], [], []>} : vector<8x128xbf16>, vector<128x128xbf16>, vector<8x128xf32> -> vector<8x128xf32>
    %c0_3 = arith.constant 0 : index
    %c0_4 = arith.constant 0 : index
    %3 = vector.load %arg4[%c0_3, %c0_4] : memref<1x128xf32, #tpu.memory_space<vmem>>, vector<1x128xf32>
    %4 = vector.broadcast %3 : vector<1x128xf32> to vector<8x128xf32>
    %5 = arith.addf %2, %4 : vector<8x128xf32>
    %6 = arith.truncf %5 : vector<8x128xf32> to vector<8x128xbf16>
    %c0_5 = arith.constant 0 : index
    %c0_6 = arith.constant 0 : index
    %7 = vector.load %arg5[%c0_5, %c0_6] : memref<8x128xbf16, #tpu.memory_space<vmem>>, vector<8x128xbf16>
    tpu.vector_store %arg5[%c0_5, %c0_6], %6 {strides = array<i32>} : memref<8x128xbf16, #tpu.memory_space<vmem>>, vector<8x128xbf16>,
    return
  }
  func.func @transform_0(%arg0: i32, %arg1: i32) -> (i32, i32) {
    %c0_i32 = arith.constant 0 : i32
    %c0_i32_0 = arith.constant 0 : i32
    return %arg0, %c0_i32 : i32, i32
  }
  func.func @transform_1(%arg0: i32, %arg1: i32) -> (i32, i32) {
    %c0_i32 = arith.constant 0 : i32
    %c0_i32_0 = arith.constant 0 : i32
    return %c0_i32, %arg1 : i32, i32
  }
  func.func @transform_2(%arg0: i32, %arg1: i32) -> (i32, i32) {
    %c0_i32 = arith.constant 0 : i32
    %c0_i32_0 = arith.constant 0 : i32
    return %c0_i32, %arg1 : i32, i32
  }
  func.func @transform_3(%arg0: i32, %arg1: i32) -> (i32, i32) {
    %c0_i32 = arith.constant 0 : i32
    return %arg0, %arg1 : i32, i32
  }
}

</mosaic_0001>

<llo_original>
// kernel: tpu_custom_call.1
$region0: #{tpu_custom_call.1}
  #allocation0 [shape = 'u32[]', space=smem, size = 0x4, offset = 0x4, fixed_abs, tag = 'smem constant byte address 0x4 - core index']
  #allocation1 [shape = 'u32[144,128]{1,0:T(1,128)}', space=vmem, size = 0x12000, scoped, tag = 'internal scratch']
  %s0 = inlined_call_operand.hbm [shape: bf16[8,128], index: 0, kind: input, shape index: {}]
  %s1 = inlined_call_operand.hbm [shape: bf16[128,128], index: 1, kind: input, shape index: {}]
  %s2 = inlined_call_operand.vmem [shape: f32[1,128], index: 2, kind: input, shape index: {}]
  %s3 = inlined_call_operand.hbm [shape: bf16[8,128], index: 3, kind: output, shape index: {}]
  %s4 = sld [smem:[#allocation0]]
  $region30: #{tpu_custom_call.1} parent=0
    _
  %s6 = ssub.s32 1, %s4
  %s7 = scalar_select 0, %s6, %s4
  $region1: #{tpu_custom_call.1} parent=0
    #allocation2 [shape = 'u8[2048]{0}', space=vmem, size = 0x800, scoped, tag = 'input window, operand 0, single buffered']
    #allocation3 [shape = 's32[1]{0}', space=sflag, size = 0x4, scoped, tag = 'scoped memory for tpu_custom_call.1']
    #allocation4 [shape = 's32[1]{0}', space=sflag, size = 0x4, scoped, tag = 'scoped memory for tpu_custom_call.1']
    #allocation5 [shape = 'u8[32768]{0}', space=vmem, size = 0x8000, scoped, tag = 'input window, operand 1, single buffered']
    #allocation6 [shape = 's32[1]{0}', space=sflag, size = 0x4, scoped, tag = 'scoped memory for tpu_custom_call.1']
    #allocation7 [shape = 'u8[2048]{0}', space=vmem, size = 0x800, scoped, tag = 'output window, operand 0, single buffered']
    %8 = vsyncpa [#allocation3], 0
    %9 = vsyncpa [#allocation6], 0
    %10 = vsyncpa [#allocation4], 0
    // Predicated region
    $region2: #{tpu_custom_call.1} parent=1 // pred_check
      _
    $region3: #{tpu_custom_call.1} parent=1 // pred_check_branch
      %12 = sbr.rel (0) target = $region5
    $region4: #{tpu_custom_call.1} parent=1 // pred_region
      %s14 = ssub.s32 64, 64
      %15 = vsyncadd [#allocation3], %s14
      %s17 = sshll.u32 [#allocation2], 4
      %s18 = int_to_ptr.vmem [resolvable:$true] %s17
      %20 = dma.hbm_to_vmem [thread:$0]  %s0, 64, %s18, [#allocation3]
    $region5: #{tpu_custom_call.1} parent=1 // pred_fallthru
      _
    // Predicated region
    $region6: #{tpu_custom_call.1} parent=1 // pred_check
      _
    $region7: #{tpu_custom_call.1} parent=1 // pred_check_branch
      %22 = sbr.rel (0) target = $region9
    $region8: #{tpu_custom_call.1} parent=1 // pred_region
      %s24 = ssub.s32 1024, 1024
      %25 = vsyncadd [#allocation6], %s24
      %s26 = sshll.u32 [#allocation5], 4
      %s27 = int_to_ptr.vmem [resolvable:$true] %s26
      %32 = dma.hbm_to_vmem [thread:$0]  %s1, 1024, %s27, [#allocation6], 64, 64, 4
    $region9: #{tpu_custom_call.1} parent=1 // pred_fallthru
      _
    // Predicated region
    $region10: #{tpu_custom_call.1} parent=1 // pred_check
      _
    $region11: #{tpu_custom_call.1} parent=1 // pred_check_branch
      %34 = sbr.rel (0) target = $region13
    $region12: #{tpu_custom_call.1} parent=1 // pred_region
      _
    $region13: #{tpu_custom_call.1} parent=1 // pred_fallthru
      _
    // Predicated region
    $region14: #{tpu_custom_call.1} parent=1 // pred_check
      _
    $region15: #{tpu_custom_call.1} parent=1 // pred_check_branch
      %36 = sbr.rel (0) target = $region17
    $region16: #{tpu_custom_call.1} parent=1 // pred_region
      %37 = dma.done [#allocation3], 64
    $region17: #{tpu_custom_call.1} parent=1 // pred_fallthru
      _
    // Predicated region
    $region18: #{tpu_custom_call.1} parent=1 // pred_check
      _
    $region19: #{tpu_custom_call.1} parent=1 // pred_check_branch
      %39 = sbr.rel (0) target = $region21
    $region20: #{tpu_custom_call.1} parent=1 // pred_region
      %40 = dma.done [#allocation6], 1024
    $region21: #{tpu_custom_call.1} parent=1 // pred_fallthru
      _
    %v42 = vld [vmem:[#allocation2] sm:$0xf]
    %v43 = vld [vmem:[#allocation5] sm:$0xf]
    %v44 = vld [vmem:[#allocation5 + $0x4] sm:$0xf]
    %v45 = vld [vmem:[#allocation5 + $0x8] sm:$0xf]
    %v46 = vld [vmem:[#allocation5 + $0xc] sm:$0xf]
    %v47 = vld [vmem:[#allocation5 + $0x10] sm:$0xf]
    %v48 = vld [vmem:[#allocation5 + $0x14] sm:$0xf]
    %v49 = vld [vmem:[#allocation5 + $0x18] sm:$0xf]
    %v50 = vld [vmem:[#allocation5 + $0x1c] sm:$0xf]
    %v51 = vld [vmem:[#allocation5 + $0x20] sm:$0xf]
    %v52 = vld [vmem:[#allocation5 + $0x24] sm:$0xf]
    %v53 = vld [vmem:[#allocation5 + $0x28] sm:$0xf]
    %v54 = vld [vmem:[#allocation5 + $0x2c] sm:$0xf]
    %v55 = vld [vmem:[#allocation5 + $0x30] sm:$0xf]
    %v56 = vld [vmem:[#allocation5 + $0x34] sm:$0xf]
    %v57 = vld [vmem:[#allocation5 + $0x38] sm:$0xf]
    %v58 = vld [vmem:[#allocation5 + $0x3c] sm:$0xf]
    %v59 = vld [vmem:[%s2] sm:$0x1]
    %v61 = vlaneseq
    %v62 = vshrl.u32 %v61, 7
    %v63 = vsub.s32 0, %v62
    %v64 = vrot.slane %v59, %v63
    %v82 = vunpack.c.l.b16 %v43
    %v83 = vunpack.c.l.b16 %v44
    %v84 = vunpack.c.l.b16 %v45
    %v85 = vunpack.c.l.b16 %v46
    %v86 = vunpack.c.l.b16 %v47
    %v87 = vunpack.c.l.b16 %v48
    %v88 = vunpack.c.l.b16 %v49
    %v89 = vunpack.c.l.b16 %v50
    %v90 = vunpack.c.l.b16 %v51
    %v91 = vunpack.c.l.b16 %v52
    %v92 = vunpack.c.l.b16 %v53
    %v93 = vunpack.c.l.b16 %v54
    %v94 = vunpack.c.l.b16 %v55
    %v95 = vunpack.c.l.b16 %v56
    %v96 = vunpack.c.l.b16 %v57
    %v97 = vunpack.c.l.b16 %v58
    %v98 = vpack.c.b16 %v83, %v82
    %v99 = vpack.c.b16 %v85, %v84
    %v100 = vpack.c.b16 %v87, %v86
    %v101 = vpack.c.b16 %v89, %v88
    %v102 = vpack.c.b16 %v91, %v90
    %v103 = vpack.c.b16 %v93, %v92
    %v104 = vpack.c.b16 %v95, %v94
    %v105 = vpack.c.b16 %v97, %v96
    %114 = vmatprep.subr.bf16.mxu0 0
    %115 = vmatpush1.bf16.msra.mxu0 %v98
    %116 = vmatprep.subr.bf16.mxu0 0
    %117 = vmatpush1.bf16.msra.mxu0 %v99
    %118 = vmatprep.subr.bf16.mxu0 0
    %119 = vmatpush1.bf16.msra.mxu0 %v100
    %120 = vmatprep.subr.bf16.mxu0 0
    %121 = vmatpush1.bf16.msra.mxu0 %v101
    %122 = vmatprep.subr.bf16.mxu0 0
    %123 = vmatpush1.bf16.msra.mxu0 %v102
    %124 = vmatprep.subr.bf16.mxu0 0
    %125 = vmatpush1.bf16.msra.mxu0 %v103
    %126 = vmatprep.subr.bf16.mxu0 0
    %127 = vmatpush1.bf16.msra.mxu0 %v104
    %128 = vmatprep.subr.bf16.mxu0 0
    %129 = vmatpush1.bf16.msra.mxu0 %v105
    %130 = vmatprep.subr.bf16.mxu0 0
    %131 = vmatpush1.bf16.msra.mxu0 0
    %132 = vmatprep.subr.bf16.mxu0 0
    %133 = vmatpush1.bf16.msra.mxu0 0
    %134 = vmatprep.subr.bf16.mxu0 0
    %135 = vmatpush1.bf16.msra.mxu0 0
    %136 = vmatprep.subr.bf16.mxu0 0
    %137 = vmatpush1.bf16.msra.mxu0 0
    %138 = vmatprep.subr.bf16.mxu0 0
    %139 = vmatpush1.bf16.msra.mxu0 0
    %140 = vmatprep.subr.bf16.mxu0 0
    %141 = vmatpush1.bf16.msra.mxu0 0
    %142 = vmatprep.subr.bf16.mxu0 0
    %143 = vmatpush1.bf16.msra.mxu0 0
    %144 = vmatprep.subr.bf16.mxu0 0
    %145 = vmatpush1.bf16.msra.mxu0 0
    %146 = vmatprep.mubr.bf16.mxu0 0
    %147 = vmatmul.mubr.bf16.gmra.mrb[0].mxu0 %v42
    %v148 = vpop.f32.mrb[0].mxu0
    %v149 = vadd.f32 %v64, %v148
    %v150 = vpop.f32.mrb[0].mxu0
    %v151 = vpop.f32.mrb[0].mxu0
    %v152 = vpop.f32.mrb[0].mxu0
    %153 = vdwg.mxu0
    %v154 = vpack.c.bf16 %v149, %v149
    %155 = vst [vmem:[#allocation7] sm:$0xf] %v154
    // Predicated region
    $region22: #{tpu_custom_call.1} parent=1 // pred_check
      _
    $region23: #{tpu_custom_call.1} parent=1 // pred_check_branch
      %157 = sbr.rel (0) target = $region25
    $region24: #{tpu_custom_call.1} parent=1 // pred_region
      %s159 = ssub.s32 64, 64
      %160 = vsyncadd [#allocation4], %s159
      %s162 = sshll.u32 [#allocation7], 4
      %s163 = int_to_ptr.vmem [resolvable:$true] %s162
      %165 = dma.vmem_to_hbm [thread:$0]  %s163, 64, %s3, [#allocation4]
    $region25: #{tpu_custom_call.1} parent=1 // pred_fallthru
      _
    // Predicated region
    $region26: #{tpu_custom_call.1} parent=1 // pred_check
      _
    $region27: #{tpu_custom_call.1} parent=1 // pred_check_branch
      %167 = sbr.rel (0) target = $region29
    $region28: #{tpu_custom_call.1} parent=1 // pred_region
      %168 = dma.done [#allocation4], 64
    $region29: #{tpu_custom_call.1} parent=1 // pred_fallthru
      _
    %169 = vsyncpa [#allocation3], 1
    %170 = vsyncpa [#allocation6], 1
    %171 = vsyncpa [#allocation4], 1

</llo_original>
